<compile_context>
chip_gen: v6e
topology: v6e:2x2x1
jax: 0.10.0
libtpu: 0.0.40
codegen_flags: <defaults>
</compile_context>

<pallas_src>
import jax
import jax.numpy as jnp
from jax.experimental import pallas as pl
from jax.experimental.pallas import tpu as pltpu


def _round_up(x, m):
    return (x + m - 1) // m * m


def _choose_tiling(B, max_tile):
    """128-granular batch padding, large tiles, and >=2 grid steps when B > 128
    so ("parallel",) can shard the batch over v7x's two TensorCores."""
    b128 = _round_up(B, 128)
    if b128 <= 128:
        return 128, 128
    n_tiles = max(2, pl.cdiv(b128, max_tile))
    tb = min(max_tile, _round_up(pl.cdiv(b128, n_tiles), 128))
    return tb, _round_up(b128, tb)


def vmpo_model_kernel(x_ref, w1_ref, wh_ref, vec_ref, out_ref):
    hidden = wh_ref.shape[1]              # 32
    n_act = out_ref.shape[0] // 2         # output rows = 2*n_act + 1

    # ---- shared: Linear(n_features, 32)  (+ free hidden-mean row) ----
    # w1_ref is (hidden+1, F): rows 0:hidden = W1, row `hidden` = column-mean of
    # W1, so haug[hidden] == mean_j(h_j) falls out of the same MXU pass.
    b1a = vec_ref[:, 0:1]                                           # (hidden+1, 1)
    haug = jnp.dot(w1_ref[...], x_ref[...],
                   preferred_element_type=jnp.float32) + b1a        # (hidden+1, TB)
    h = haug[:hidden, :]                                            # (hidden, TB)
    mean = haug[hidden:hidden + 1, :]                               # (1, TB)

    # ---- LayerNorm(32): single-pass variance, one (h - mean) temp, ReLU ----
    ex2 = jnp.sum(h * h, axis=0, keepdims=True) * (1.0 / hidden)    # (1, TB)
    var = ex2 - mean * mean
    rstd = jax.lax.rsqrt(var + 1e-5)                                # eps = 1e-5
    g = vec_ref[:hidden, 1:2]                                       # (hidden, 1)
    beta = vec_ref[:hidden, 2:3]
    hr = jnp.maximum((h - mean) * (g * rstd) + beta, 0.0)           # (hidden, TB)

    # ---- fused policy+value head: one (n_act+1, hidden) @ (hidden, TB) ----
    bh = vec_ref[:n_act + 1, 3:4]
    head = jnp.dot(wh_ref[...], hr,
                   preferred_element_type=jnp.float32) + bh         # (n_act+1, TB)
    logit = head[:n_act, :]
    value = head[n_act:, :]

    # ---- stable softmax / log_softmax over the action axis (axis 0) ----
    m = jnp.max(logit, axis=0, keepdims=True)
    z = logit - m
    ez = jnp.exp(z)
    se = jnp.sum(ez, axis=0, keepdims=True)
    r = pl.reciprocal(se, approx=True)                              # EUP slot
    r = r * (2.0 - se * r)                                          # Newton step -> ~f32 accurate

    out_ref[0:n_act, :] = z - jnp.log(se)                           # log-probs
    out_ref[n_act:2 * n_act, :] = ez * r                            # probs
    out_ref[2 * n_act:, :] = value                                  # value


def vmpo_forward(x, params, *, max_tile=8192):
    """Whole forward pass in one batch-tiled Pallas TPU kernel."""
    B, n_features = x.shape
    hidden = params["w1"].shape[0]
    n_act = params["wp"].shape[0]
    out_rows = 2 * n_act + 1

    TB, B_pad = _choose_tiling(B, max_tile)
    grid = (B_pad // TB,)

    # Single fused pre-pass: zero-pad the batch and flip to (feature, batch) in
    # one copy (the pad fuses into the transpose producer).
    x = x.astype(jnp.float32)
    if B_pad != B:
        x = jnp.pad(x, ((0, B_pad - B), (0, 0)))
    xt = x.T                                                        # (n_features, B_pad)

    # Tiny parameter prep (once per call):
    #  * W1 augmented with its column-mean row -> hidden-mean rides the MXU
    #  * policy + value heads fused into one (n_act+1, hidden) matrix
    #  * all small vectors packed into a single resident (hidden+1, 4) array
    w1 = params["w1"].astype(jnp.float32)                           # (hidden, F)
    b1 = params["b1"].reshape(-1).astype(jnp.float32)               # (hidden,)
    w1_aug = jnp.concatenate([w1, jnp.mean(w1, axis=0, keepdims=True)], axis=0)
    b1_aug = jnp.concatenate([b1, jnp.mean(b1, keepdims=True)])
    wh = jnp.concatenate([params["wp"], params["wv"]], axis=0).astype(jnp.float32)
    bh = jnp.concatenate([params["bp"].reshape(-1),
                          params["bv"].reshape(-1)]).astype(jnp.float32)
    vecs = jnp.zeros((hidden + 1, 4), jnp.float32)
    vecs = vecs.at[:, 0].set(b1_aug)                                # col 0: b1 (+mean row)
    vecs = vecs.at[:hidden, 1].set(params["ln_g"].reshape(-1))      # col 1: LN gamma
    vecs = vecs.at[:hidden, 2].set(params["ln_b"].reshape(-1))      # col 2: LN beta
    vecs = vecs.at[:n_act + 1, 3].set(bh)                           # col 3: head bias

    def resident(shape):
        # Weights/biases: same block every grid step -> fetched once, stay in VMEM.
        return pl.BlockSpec(shape, lambda i: (0, 0))

    # Double-buffered streaming working set + headroom (residents are tiny).
    vmem_need = 2 * (n_features + out_rows) * TB * 4 + (2 << 20)
    vmem_bytes = int(min(64 << 20, max(32 << 20, vmem_need)))

    stacked = pl.pallas_call(
        vmpo_model_kernel,
        out_shape=jax.ShapeDtypeStruct((out_rows, B_pad), jnp.float32),
        grid=grid,
        in_specs=[
            pl.BlockSpec((n_features, TB), lambda i: (0, i)),       # x tile
            resident((hidden + 1, n_features)),                     # W1 (+ mean row)
            resident((n_act + 1, hidden)),                          # fused head W
            resident((hidden + 1, 4)),                              # packed vectors
        ],
        out_specs=pl.BlockSpec((out_rows, TB), lambda i: (0, i)),   # stacked outputs
        compiler_params=pltpu.CompilerParams(
            dimension_semantics=("parallel",),                      # dual-TC on v7x
            vmem_limit_bytes=vmem_bytes),
    )(xt, w1_aug, wh, vecs)

    # Back to PyTorch conventions: (B, 1), (B, n_actions), (B, n_actions).
    logp = stacked[0:n_act, :B].T
    p = stacked[n_act:2 * n_act, :B].T
    v = stacked[2 * n_act:, :B].T
    return v, logp, p


def init_params(key, n_features, n_actions, hidden=32):
    """Deterministic init matching Model._init_weights (normal std=0.02, zero bias)."""
    k1, k2, k3 = jax.random.split(key, 3)
    std = 0.02
    return {
        "w1": std * jax.random.normal(k1, (hidden, n_features), jnp.float32),
        "b1": jnp.zeros((1, hidden), jnp.float32),
        "ln_g": jnp.ones((1, hidden), jnp.float32),
        "ln_b": jnp.zeros((1, hidden), jnp.float32),
        "wp": std * jax.random.normal(k2, (n_actions, hidden), jnp.float32),
        "bp": jnp.zeros((1, n_actions), jnp.float32),
        "wv": std * jax.random.normal(k3, (1, hidden), jnp.float32),
        "bv": jnp.zeros((1, 1), jnp.float32),
    }


if __name__ == "__main__":
    B, n_features, n_actions = 8, 16, 4

    key = jax.random.PRNGKey(0)
    kx, kp = jax.random.split(key)
    x = jax.random.normal(kx, (B, n_features), jnp.float32)
    params = init_params(kp, n_features, n_actions)

    v, logp, p = jax.jit(vmpo_forward)(x, params)
    jax.block_until_ready((v, logp, p))

    # quick sanity vs. pure-JAX reference (PyTorch semantics, f32)
    h = x @ params["w1"].T + params["b1"]
    mu = h.mean(-1, keepdims=True)
    var = ((h - mu) ** 2).mean(-1, keepdims=True)
    hr = jnp.maximum((h - mu) / jnp.sqrt(var + 1e-5) * params["ln_g"] + params["ln_b"], 0.0)
    v_ref = hr @ params["wv"].T + params["bv"]
    logit_ref = hr @ params["wp"].T + params["bp"]
    logp_ref = jax.nn.log_softmax(logit_ref, -1)
    p_ref = jax.nn.softmax(logit_ref, -1)

    assert v.shape == (B, 1) and logp.shape == (B, n_actions) and p.shape == (B, n_actions)
    assert jnp.allclose(v, v_ref, atol=1e-5)
    assert jnp.allclose(logp, logp_ref, atol=1e-5)
    assert jnp.allclose(p, p_ref, atol=1e-5)

    print("KERNEL_OK")
</pallas_src>

<mosaic_0001>
module attributes {stable_mosaic.version = 11 : i64} {
  func.func @vmpo_model_kernel(%arg0: i32, %arg1: memref<16x128xf32, #tpu.memory_space<vmem>>, %arg2: memref<33x16xf32, #tpu.memory_space<vmem>>, %arg3: memref<5x32xf32, #tpu.memory_space<vmem>>, %arg4: memref<33x4xf32, #tpu.memory_space<vmem>>, %arg5: memref<9x128xf32, #tpu.memory_space<vmem>>) attributes {dimension_semantics = [#tpu.dimension_semantics<parallel>], iteration_bounds = array<i64: 1>, scalar_prefetch = 0 : i64, scratch_operands = 0 : i64, tpu.core_type = #tpu.core_type<tc>, window_params = [{transform_indices = @transform_0, window_bounds = array<i64: 16, 128>}, {pipeline_mode = #tpu.pipeline_mode<synchronous>, transform_indices = @transform_1, window_bounds = array<i64: 33, 16>}, {pipeline_mode = #tpu.pipeline_mode<synchronous>, transform_indices = @transform_2, window_bounds = array<i64: 5, 32>}, {pipeline_mode = #tpu.pipeline_mode<synchronous>, transform_indices = @transform_3, window_bounds = array<i64: 33, 4>}, {transform_indices = @transform_4, window_bounds = array<i64: 9, 128>}]} {
    %c0 = arith.constant 0 : index
    %c0_0 = arith.constant 0 : index
    %0 = vector.load %arg4[%c0, %c0_0] : memref<33x4xf32, #tpu.memory_space<vmem>>, vector<33x1xf32>
    %c0_1 = arith.constant 0 : index
    %c0_2 = arith.constant 0 : index
    %1 = vector.load %arg2[%c0_1, %c0_2] : memref<33x16xf32, #tpu.memory_space<vmem>>, vector<33x16xf32>
    %c0_3 = arith.constant 0 : index
    %c0_4 = arith.constant 0 : index
    %2 = vector.load %arg1[%c0_3, %c0_4] : memref<16x128xf32, #tpu.memory_space<vmem>>, vector<16x128xf32>
    %cst = arith.constant dense<0.000000e+00> : vector<33x128xf32>
    %3 = tpu.matmul %1, %2, %cst {dimension_numbers = #tpu.dot_dimension_numbers<[1], [0], [0], [1], [0, 0, 1, 1], [], []>} : vector<33x16xf32>, vector<16x128xf32>, vector<33x128xf32> -> vector<33x128xf32>
    %4 = vector.broadcast %0 : vector<33x1xf32> to vector<33x128xf32>
    %5 = arith.addf %3, %4 : vector<33x128xf32>
    %6 = vector.extract_strided_slice %5 {offsets = [0, 0], sizes = [32, 128], strides = [1, 1]} : vector<33x128xf32> to vector<32x128xf32>
    %7 = vector.extract_strided_slice %5 {offsets = [32, 0], sizes = [1, 128], strides = [1, 1]} : vector<33x128xf32> to vector<1x128xf32>
    %8 = arith.mulf %6, %6 : vector<32x128xf32>
    %cst_5 = arith.constant dense<0.000000e+00> : vector<128xf32>
    %9 = vector.multi_reduction <add>, %8, %cst_5 [0] : vector<32x128xf32> to vector<128xf32>
    %10 = vector.shape_cast %9 : vector<128xf32> to vector<1x128xf32>
    %cst_6 = arith.constant 3.125000e-02 : f32
    %11 = vector.broadcast %cst_6 : f32 to vector<1x128xf32>
    %12 = arith.mulf %10, %11 : vector<1x128xf32>
    %13 = arith.mulf %7, %7 : vector<1x128xf32>
    %14 = arith.subf %12, %13 : vector<1x128xf32>
    %cst_7 = arith.constant 9.99999974E-6 : f32
    %15 = vector.broadcast %cst_7 : f32 to vector<1x128xf32>
    %16 = arith.addf %14, %15 : vector<1x128xf32>
    %17 = math.rsqrt %16 : vector<1x128xf32>
    %c0_8 = arith.constant 0 : index
    %c1 = arith.constant 1 : index
    %18 = vector.load %arg4[%c0_8, %c1] : memref<33x4xf32, #tpu.memory_space<vmem>>, vector<32x1xf32>
    %c0_9 = arith.constant 0 : index
    %c2 = arith.constant 2 : index
    %19 = vector.load %arg4[%c0_9, %c2] : memref<33x4xf32, #tpu.memory_space<vmem>>, vector<32x1xf32>
    %20 = vector.broadcast %7 : vector<1x128xf32> to vector<32x128xf32>
    %21 = arith.subf %6, %20 : vector<32x128xf32>
    %22 = vector.broadcast %18 : vector<32x1xf32> to vector<32x128xf32>
    %23 = vector.broadcast %17 : vector<1x128xf32> to vector<32x128xf32>
    %24 = arith.mulf %22, %23 : vector<32x128xf32>
    %25 = arith.mulf %21, %24 : vector<32x128xf32>
    %26 = vector.broadcast %19 : vector<32x1xf32> to vector<32x128xf32>
    %27 = arith.addf %25, %26 : vector<32x128xf32>
    %cst_10 = arith.constant 0.000000e+00 : f32
    %28 = vector.broadcast %cst_10 : f32 to vector<32x128xf32>
    %29 = arith.maximumf %27, %28 : vector<32x128xf32>
    %c0_11 = arith.constant 0 : index
    %c3 = arith.constant 3 : index
    %30 = vector.load %arg4[%c0_11, %c3] : memref<33x4xf32, #tpu.memory_space<vmem>>, vector<5x1xf32>
    %c0_12 = arith.constant 0 : index
    %c0_13 = arith.constant 0 : index
    %31 = vector.load %arg3[%c0_12, %c0_13] : memref<5x32xf32, #tpu.memory_space<vmem>>, vector<5x32xf32>
    %cst_14 = arith.constant dense<0.000000e+00> : vector<5x128xf32>
    %32 = tpu.matmul %31, %29, %cst_14 {dimension_numbers = #tpu.dot_dimension_numbers<[1], [0], [0], [1], [0, 0, 1, 1], [], []>} : vector<5x32xf32>, vector<32x128xf32>, vector<5x128xf32> -> vector<5x128xf32>
    %33 = vector.broadcast %30 : vector<5x1xf32> to vector<5x128xf32>
    %34 = arith.addf %32, %33 : vector<5x128xf32>
    %35 = vector.extract_strided_slice %34 {offsets = [0, 0], sizes = [4, 128], strides = [1, 1]} : vector<5x128xf32> to vector<4x128xf32>
    %36 = vector.extract_strided_slice %34 {offsets = [4, 0], sizes = [1, 128], strides = [1, 1]} : vector<5x128xf32> to vector<1x128xf32>
    %cst_15 = arith.constant dense<0xFF800000> : vector<128xf32>
    %37 = vector.multi_reduction <maximumf>, %35, %cst_15 [0] : vector<4x128xf32> to vector<128xf32>
    %38 = vector.shape_cast %37 : vector<128xf32> to vector<1x128xf32>
    %39 = vector.broadcast %38 : vector<1x128xf32> to vector<4x128xf32>
    %40 = arith.subf %35, %39 : vector<4x128xf32>
    %41 = math.exp %40 : vector<4x128xf32>
    %cst_16 = arith.constant dense<0.000000e+00> : vector<128xf32>
    %42 = vector.multi_reduction <add>, %41, %cst_16 [0] : vector<4x128xf32> to vector<128xf32>
    %43 = vector.shape_cast %42 : vector<128xf32> to vector<1x128xf32>
    %44 = tpu.reciprocal %43 {approx = true} : vector<1x128xf32> -> vector<1x128xf32>
    %45 = arith.mulf %43, %44 : vector<1x128xf32>
    %cst_17 = arith.constant 2.000000e+00 : f32
    %46 = vector.broadcast %cst_17 : f32 to vector<1x128xf32>
    %47 = arith.subf %46, %45 : vector<1x128xf32>
    %48 = arith.mulf %44, %47 : vector<1x128xf32>
    %49 = math.log %43 : vector<1x128xf32>
    %50 = vector.broadcast %49 : vector<1x128xf32> to vector<4x128xf32>
    %51 = arith.subf %40, %50 : vector<4x128xf32>
    %c0_18 = arith.constant 0 : index
    %c0_19 = arith.constant 0 : index
    %52 = vector.load %arg5[%c0_18, %c0_19] : memref<9x128xf32, #tpu.memory_space<vmem>>, vector<4x128xf32>
    tpu.vector_store %arg5[%c0_18, %c0_19], %51 {strides = array<i32>} : memref<9x128xf32, #tpu.memory_space<vmem>>, vector<4x128xf32>,
    %53 = vector.broadcast %48 : vector<1x128xf32> to vector<4x128xf32>
    %54 = arith.mulf %41, %53 : vector<4x128xf32>
    %c4 = arith.constant 4 : index
    %c0_20 = arith.constant 0 : index
    %55 = vector.load %arg5[%c4, %c0_20] : memref<9x128xf32, #tpu.memory_space<vmem>>, vector<4x128xf32>
    tpu.vector_store %arg5[%c4, %c0_20], %54 {strides = array<i32>} : memref<9x128xf32, #tpu.memory_space<vmem>>, vector<4x128xf32>,
    %c8 = arith.constant 8 : index
    %c0_21 = arith.constant 0 : index
    %56 = vector.load %arg5[%c8, %c0_21] : memref<9x128xf32, #tpu.memory_space<vmem>>, vector<1x128xf32>
    tpu.vector_store %arg5[%c8, %c0_21], %36 {strides = array<i32>} : memref<9x128xf32, #tpu.memory_space<vmem>>, vector<1x128xf32>,
    return
  }
  func.func @transform_0(%arg0: i32) -> (i32, i32) {
    %c0_i32 = arith.constant 0 : i32
    %c0_i32_0 = arith.constant 0 : i32
    return %c0_i32, %arg0 : i32, i32
  }
  func.func @transform_1(%arg0: i32) -> (i32, i32) {
    %c0_i32 = arith.constant 0 : i32
    %c0_i32_0 = arith.constant 0 : i32
    %c0_i32_1 = arith.constant 0 : i32
    return %c0_i32, %c0_i32_0 : i32, i32
  }
  func.func @transform_2(%arg0: i32) -> (i32, i32) {
    %c0_i32 = arith.constant 0 : i32
    %c0_i32_0 = arith.constant 0 : i32
    %c0_i32_1 = arith.constant 0 : i32
    return %c0_i32, %c0_i32_0 : i32, i32
  }
  func.func @transform_3(%arg0: i32) -> (i32, i32) {
    %c0_i32 = arith.constant 0 : i32
    %c0_i32_0 = arith.constant 0 : i32
    %c0_i32_1 = arith.constant 0 : i32
    return %c0_i32, %c0_i32_0 : i32, i32
  }
  func.func @transform_4(%arg0: i32) -> (i32, i32) {
    %c0_i32 = arith.constant 0 : i32
    %c0_i32_0 = arith.constant 0 : i32
    return %c0_i32, %arg0 : i32, i32
  }
}

</mosaic_0001>

<llo_original>
// kernel: vmpo_forward.1
$region0: #{vmpo_forward.1}
  #allocation0 [shape = 'u32[]', space=smem, size = 0x4, offset = 0x4, fixed_abs, tag = 'smem constant byte address 0x4 - core index']
  #allocation1 [shape = 'u32[144,128]{1,0:T(1,128)}', space=vmem, size = 0x12000, scoped, tag = 'internal scratch']
  %s0 = inlined_call_operand.vmem [shape: f32[16,128], index: 0, kind: input, shape index: {}]
  %s1 = inlined_call_operand.vmem [shape: f32[33,16], index: 1, kind: input, shape index: {}]
  %s2 = inlined_call_operand.vmem [shape: f32[5,32], index: 2, kind: input, shape index: {}]
  %s3 = inlined_call_operand.vmem [shape: f32[33,4], index: 3, kind: input, shape index: {}]
  %s4 = inlined_call_operand.vmem [shape: f32[9,128], index: 4, kind: output, shape index: {}]
  %s5 = sld [smem:[#allocation0]]
  $region26: #{vmpo_forward.1} parent=0
    _
  %s7 = ssub.s32 1, %s5
  %s8 = scalar_select 0, %s7, %s5
  // Predicated region
  $region2: #{vmpo_forward.1} parent=0 // pred_check
    _
  $region3: #{vmpo_forward.1} parent=0 // pred_check_branch
    %10 = sbr.rel (0) target = $region5
  $region4: #{vmpo_forward.1} parent=0 // pred_region
    _
  $region5: #{vmpo_forward.1} parent=0 // pred_fallthru
    _
  // Predicated region
  $region6: #{vmpo_forward.1} parent=0 // pred_check
    _
  $region7: #{vmpo_forward.1} parent=0 // pred_check_branch
    %12 = sbr.rel (0) target = $region9
  $region8: #{vmpo_forward.1} parent=0 // pred_region
    _
  $region9: #{vmpo_forward.1} parent=0 // pred_fallthru
    _
  // Predicated region
  $region10: #{vmpo_forward.1} parent=0 // pred_check
    _
  $region11: #{vmpo_forward.1} parent=0 // pred_check_branch
    %14 = sbr.rel (0) target = $region13
  $region12: #{vmpo_forward.1} parent=0 // pred_region
    _
  $region13: #{vmpo_forward.1} parent=0 // pred_fallthru
    _
  // Predicated region
  $region14: #{vmpo_forward.1} parent=0 // pred_check
    _
  $region15: #{vmpo_forward.1} parent=0 // pred_check_branch
    %16 = sbr.rel (0) target = $region17
  $region16: #{vmpo_forward.1} parent=0 // pred_region
    _
  $region17: #{vmpo_forward.1} parent=0 // pred_fallthru
    _
  %v17 = vld [vmem:[%s3] sm:$0xff]
  %v18 = vld [vmem:[%s3 + $0x8] sm:$0xff]
  %v19 = vld [vmem:[%s3 + $0x10] sm:$0xff]
  %v20 = vld [vmem:[%s3 + $0x18] sm:$0xff]
  %v21 = vld [vmem:[%s3 + $0x20] sm:$0x1]
  %v22 = vld [vmem:[%s1] sm:$0xff]
  %v23 = vld [vmem:[%s1 + $0x8] sm:$0xff]
  %v24 = vld [vmem:[%s1 + $0x10] sm:$0xff]
  %v25 = vld [vmem:[%s1 + $0x18] sm:$0xff]
  %v26 = vld [vmem:[%s1 + $0x20] sm:$0x1]
  %v27 = vld [vmem:[%s0] sm:$0xff]
  %v28 = vld [vmem:[%s0 + $0x8] sm:$0xff]
  %30 = vset.pattern.permute.xlu0 0
  %31 = vperm.xlu0 %30, %v17
  %v32 = vpop.permute.xlu0 %31
  %35 = vset.pattern.permute.xlu0 0
  %36 = vperm.xlu0 %35, %v18
  %v37 = vpop.permute.xlu0 %36
  %40 = vset.pattern.permute.xlu0 0
  %41 = vperm.xlu0 %40, %v19
  %v42 = vpop.permute.xlu0 %41
  %45 = vset.pattern.permute.xlu0 0
  %46 = vperm.xlu0 %45, %v20
  %v47 = vpop.permute.xlu0 %46
  %50 = vset.pattern.permute.xlu0 0
  %51 = vperm.xlu0 %50, %v21
  %v52 = vpop.permute.xlu0 %51
  %vm54 = vcmask 130048
  %v56 = vsel %vm54, %v22, 0
  %v59 = vsel %vm54, %v23, 0
  %v62 = vsel %vm54, %v24, 0
  %v65 = vsel %vm54, %v25, 0
  %v68 = vsel %vm54, %v26, 0
  %70 = vmatprep.subr.mxu0 0.0
  %71 = vmatpush1.msra.mxu0 0.0
  %72 = vmatprep.subr.mxu0 0.0
  %73 = vmatpush1.msra.mxu0 0.0
  %74 = vmatprep.subr.mxu0 0.0
  %75 = vmatpush1.msra.mxu0 0.0
  %76 = vmatprep.subr.mxu0 0.0
  %77 = vmatpush1.msra.mxu0 0.0
  %78 = vmatprep.subr.mxu0 0.0
  %79 = vmatpush1.msra.mxu0 0.0
  %80 = vmatprep.subr.mxu0 0.0
  %81 = vmatpush1.msra.mxu0 0.0
  %82 = vmatprep.subr.mxu0 0.0
  %83 = vmatpush1.msra.mxu0 0.0
  %84 = vmatprep.subr.mxu0 0.0
  %85 = vmatpush1.msra.mxu0 0.0
  %86 = vmatprep.subr.mxu0 0.0
  %87 = vmatpush1.msra.mxu0 0.0
  %88 = vmatprep.subr.mxu0 0.0
  %89 = vmatpush1.msra.mxu0 0.0
  %90 = vmatprep.subr.mxu0 0.0
  %91 = vmatpush1.msra.mxu0 0.0
  %92 = vmatprep.subr.mxu0 0.0
  %93 = vmatpush1.msra.mxu0 0.0
  %94 = vmatprep.subr.mxu0 0.0
  %95 = vmatpush1.msra.mxu0 0.0
  %96 = vmatprep.subr.mxu0 0.0
  %97 = vmatpush1.msra.mxu0 0.0
  %98 = vmatprep.subr.mxu0 0.0
  %99 = vmatpush1.msra.mxu0 %v28
  %100 = vmatprep.subr.mxu0 0.0
  %101 = vmatpush1.msra.mxu0 %v27
  %102 = vmatprep.subr.mxu0 0.0
  %103 = vmatpush2.msra.mxu0 0.0
  %104 = vmatprep.subr.mxu0 0.0
  %105 = vmatpush2.msra.mxu0 0.0
  %106 = vmatprep.subr.mxu0 0.0
  %107 = vmatpush2.msra.mxu0 0.0
  %108 = vmatprep.subr.mxu0 0.0
  %109 = vmatpush2.msra.mxu0 0.0
  %110 = vmatprep.subr.mxu0 0.0
  %111 = vmatpush2.msra.mxu0 0.0
  %112 = vmatprep.subr.mxu0 0.0
  %113 = vmatpush2.msra.mxu0 0.0
  %114 = vmatprep.subr.mxu0 0.0
  %115 = vmatpush2.msra.mxu0 0.0
  %116 = vmatprep.subr.mxu0 0.0
  %117 = vmatpush2.msra.mxu0 0.0
  %118 = vmatprep.subr.mxu0 0.0
  %119 = vmatpush2.msra.mxu0 0.0
  %120 = vmatprep.subr.mxu0 0.0
  %121 = vmatpush2.msra.mxu0 0.0
  %122 = vmatprep.subr.mxu0 0.0
  %123 = vmatpush2.msra.mxu0 0.0
  %124 = vmatprep.subr.mxu0 0.0
  %125 = vmatpush2.msra.mxu0 0.0
  %126 = vmatprep.subr.mxu0 0.0
  %127 = vmatpush2.msra.mxu0 0.0
  %128 = vmatprep.subr.mxu0 0.0
  %129 = vmatpush2.msra.mxu0 0.0
  %130 = vmatprep.subr.mxu0 0.0
  %131 = vmatpush2.msra.mxu0 0.0
  %132 = vmatprep.subr.mxu0 0.0
  %133 = vmatpush2.msra.mxu0 0.0
  %134 = vmatprep.mubr.f32.mxu0 0.0
  %135 = vmatmul.mubr.f32.gmra.mxu0 %v56
  %v136 = vpop.f32.mrf.mxu0
  %v137 = vadd.f32 %v32, %v136
  %v138 = vpop.f32.mrf.mxu0
  %139 = vmatprep.mubr.f32.mxu0 0.0
  %140 = vmatmul.mubr.f32.gmra.mxu0 %v59
  %v141 = vpop.f32.mrf.mxu0
  %v142 = vadd.f32 %v37, %v141
  %v143 = vpop.f32.mrf.mxu0
  %144 = vmatprep.mubr.f32.mxu0 0.0
  %145 = vmatmul.mubr.f32.gmra.mxu0 %v62
  %v146 = vpop.f32.mrf.mxu0
  %v147 = vadd.f32 %v42, %v146
  %v148 = vpop.f32.mrf.mxu0
  %149 = vmatprep.mubr.f32.mxu0 0.0
  %150 = vmatmul.mubr.f32.gmra.mxu0 %v65
  %v151 = vpop.f32.mrf.mxu0
  %v152 = vadd.f32 %v47, %v151
  %v153 = vpop.f32.mrf.mxu0
  %154 = vmatprep.mubr.f32.mxu0 0.0
  %155 = vmatmul.mubr.f32.gmra.mxu0 %v68
  %v156 = vpop.f32.mrf.mxu0
  %v157 = vadd.f32 %v52, %v156
  %v158 = vpop.f32.mrf.mxu0
  %159 = vdwg.mxu0
  %v160 = vmul.f32 %v137, %v137
  %v161 = vmul.f32 %v142, %v142
  %v162 = vmul.f32 %v147, %v147
  %v163 = vmul.f32 %v152, %v152
  %v164 = vadd.f32 %v160, %v161
  %v165 = vadd.f32 %v164, %v162
  %v166 = vadd.f32 %v165, %v163
  %v167 = vrot.slane %v166, 4
  %v168 = vadd.f32 %v166, %v167
  %v169 = vrot.slane %v168, 2
  %v170 = vadd.f32 %v168, %v169
  %v171 = vrot.slane %v170, 1
  %v172 = vadd.f32 %v170, %v171
  %v173 = vmul.f32 %v172, 0.03125
  %v174 = vmul.f32 %v157, %v157
  %v175 = vsub.f32 %v173, %v174
  %v176 = vadd.f32 %v175, 1e-05
  %v177 = vrsqrt.pop %v176
  %v178 = vld [vmem:[%s3] sm:$0xff]
  %v179 = vld [vmem:[%s3 + $0x8] sm:$0xff]
  %v180 = vld [vmem:[%s3 + $0x10] sm:$0xff]
  %v181 = vld [vmem:[%s3 + $0x18] sm:$0xff]
  %v182 = vlaneseq
  %v183 = vshrl.u32 %v182, 7
  %v184 = vsub.s32 0, %v183
  %v185 = vrot.slane %v157, %v184
  %v186 = vsub.f32 %v137, %v185
  %v187 = vsub.f32 %v142, %v185
  %v188 = vsub.f32 %v147, %v185
  %v189 = vsub.f32 %v152, %v185
  %191 = vset.pattern.permute.xlu0 1
  %192 = vperm.xlu0 %191, %v178
  %v193 = vpop.permute.xlu0 %192
  %196 = vset.pattern.permute.xlu0 1
  %197 = vperm.xlu0 %196, %v179
  %v198 = vpop.permute.xlu0 %197
  %201 = vset.pattern.permute.xlu0 1
  %202 = vperm.xlu0 %201, %v180
  %v203 = vpop.permute.xlu0 %202
  %206 = vset.pattern.permute.xlu0 1
  %207 = vperm.xlu0 %206, %v181
  %v208 = vpop.permute.xlu0 %207
  %v210 = vlaneseq
  %v211 = vshrl.u32 %v210, 7
  %v212 = vsub.s32 0, %v211
  %v213 = vrot.slane %v177, %v212
  %v214 = vmul.f32 %v193, %v213
  %v215 = vmul.f32 %v198, %v213
  %v216 = vmul.f32 %v203, %v213
  %v217 = vmul.f32 %v208, %v213
  %v218 = vmul.f32 %v186, %v214
  %v219 = vmul.f32 %v187, %v215
  %v220 = vmul.f32 %v188, %v216
  %v221 = vmul.f32 %v189, %v217
  %222 = vset.pattern.permute.xlu0 2
  %223 = vperm.xlu0 %222, %v178
  %v224 = vpop.permute.xlu0 %223
  %226 = vset.pattern.permute.xlu0 2
  %227 = vperm.xlu0 %226, %v179
  %v228 = vpop.permute.xlu0 %227
  %230 = vset.pattern.permute.xlu0 2
  %231 = vperm.xlu0 %230, %v180
  %v232 = vpop.permute.xlu0 %231
  %234 = vset.pattern.permute.xlu0 2
  %235 = vperm.xlu0 %234, %v181
  %v236 = vpop.permute.xlu0 %235
  %v238 = vadd.f32 %v218, %v224
  %v239 = vadd.f32 %v219, %v228
  %v240 = vadd.f32 %v220, %v232
  %v241 = vadd.f32 %v221, %v236
  %v242 = vmax.f32 %v238, 0.0
  %v243 = vmax.f32 %v239, 0.0
  %v244 = vmax.f32 %v240, 0.0
  %v245 = vmax.f32 %v241, 0.0
  %v246 = vld [vmem:[%s3] sm:$0x1f]
  %v247 = vld [vmem:[%s2] sm:$0x1f]
  %249 = vset.pattern.permute.xlu0 3
  %250 = vperm.xlu0 %249, %v246
  %v251 = vpop.permute.xlu0 %250
  %vm253 = vcmask 261120
  %v255 = vsel %vm253, %v247, 0
  %257 = vmatprep.subr.mxu0 0.0
  %258 = vmatpush1.msra.mxu0 0.0
  %259 = vmatprep.subr.mxu0 0.0
  %260 = vmatpush1.msra.mxu0 0.0
  %261 = vmatprep.subr.mxu0 0.0
  %262 = vmatpush1.msra.mxu0 0.0
  %263 = vmatprep.subr.mxu0 0.0
  %264 = vmatpush1.msra.mxu0 0.0
  %265 = vmatprep.subr.mxu0 0.0
  %266 = vmatpush1.msra.mxu0 0.0
  %267 = vmatprep.subr.mxu0 0.0
  %268 = vmatpush1.msra.mxu0 0.0
  %269 = vmatprep.subr.mxu0 0.0
  %270 = vmatpush1.msra.mxu0 0.0
  %271 = vmatprep.subr.mxu0 0.0
  %272 = vmatpush1.msra.mxu0 0.0
  %273 = vmatprep.subr.mxu0 0.0
  %274 = vmatpush1.msra.mxu0 0.0
  %275 = vmatprep.subr.mxu0 0.0
  %276 = vmatpush1.msra.mxu0 0.0
  %277 = vmatprep.subr.mxu0 0.0
  %278 = vmatpush1.msra.mxu0 0.0
  %279 = vmatprep.subr.mxu0 0.0
  %280 = vmatpush1.msra.mxu0 0.0
  %281 = vmatprep.subr.mxu0 0.0
  %282 = vmatpush1.msra.mxu0 %v245
  %283 = vmatprep.subr.mxu0 0.0
  %284 = vmatpush1.msra.mxu0 %v244
  %285 = vmatprep.subr.mxu0 0.0
  %286 = vmatpush1.msra.mxu0 %v243
  %287 = vmatprep.subr.mxu0 0.0
  %288 = vmatpush1.msra.mxu0 %v242
  %289 = vmatprep.subr.mxu0 0.0
  %290 = vmatpush2.msra.mxu0 0.0
  %291 = vmatprep.subr.mxu0 0.0
  %292 = vmatpush2.msra.mxu0 0.0
  %293 = vmatprep.subr.mxu0 0.0
  %294 = vmatpush2.msra.mxu0 0.0
  %295 = vmatprep.subr.mxu0 0.0
  %296 = vmatpush2.msra.mxu0 0.0
  %297 = vmatprep.subr.mxu0 0.0
  %298 = vmatpush2.msra.mxu0 0.0
  %299 = vmatprep.subr.mxu0 0.0
  %300 = vmatpush2.msra.mxu0 0.0
  %301 = vmatprep.subr.mxu0 0.0
  %302 = vmatpush2.msra.mxu0 0.0
  %303 = vmatprep.subr.mxu0 0.0
  %304 = vmatpush2.msra.mxu0 0.0
  %305 = vmatprep.subr.mxu0 0.0
  %306 = vmatpush2.msra.mxu0 0.0
  %307 = vmatprep.subr.mxu0 0.0
  %308 = vmatpush2.msra.mxu0 0.0
  %309 = vmatprep.subr.mxu0 0.0
  %310 = vmatpush2.msra.mxu0 0.0
  %311 = vmatprep.subr.mxu0 0.0
  %312 = vmatpush2.msra.mxu0 0.0
  %313 = vmatprep.subr.mxu0 0.0
  %314 = vmatpush2.msra.mxu0 0.0
  %315 = vmatprep.subr.mxu0 0.0
  %316 = vmatpush2.msra.mxu0 0.0
  %317 = vmatprep.subr.mxu0 0.0
  %318 = vmatpush2.msra.mxu0 0.0
  %319 = vmatprep.subr.mxu0 0.0
  %320 = vmatpush2.msra.mxu0 0.0
  %321 = vmatprep.mubr.f32.mxu0 0.0
  %322 = vmatmul.mubr.f32.gmra.mxu0 %v255
  %v323 = vpop.f32.mrf.mxu0
  %v324 = vadd.f32 %v251, %v323
  %v325 = vpop.f32.mrf.mxu0
  %326 = vdwg.mxu0
  %vm327 = vcmask 1043456
  %v328 = vsel %vm327, %v324, -inf
  %v329 = vrot.slane %v328, 4
  %v330 = vmax.f32 %v328, %v329
  %v331 = vrot.slane %v330, 2
  %v332 = vmax.f32 %v330, %v331
  %v333 = vrot.slane %v332, 1
  %v334 = vmax.f32 %v332, %v333
  %v335 = vsub.f32 %v324, %v334
  %v336 = vmul.f32 %v335, 1.442695
  %v337 = vpow.pop %v336
  %v338 = vsel %vm327, %v337, 0.0
  %v339 = vrot.slane %v338, 4
  %v340 = vadd.f32 %v338, %v339
  %v341 = vrot.slane %v340, 2
  %v342 = vadd.f32 %v340, %v341
  %v343 = vrot.slane %v342, 1
  %v344 = vadd.f32 %v342, %v343
  %v345 = vrcp.pop %v344
  %v346 = vmul.f32 %v344, %v345
  %v347 = vsub.f32 2.0, %v346
  %v348 = vmul.f32 %v345, %v347
  %v349 = vlog2.pop %v344
  %v350 = vmul.f32 %v349, 0.6931472
  %v351 = vsub.f32 %v335, %v350
  %352 = vst [vmem:[%s4] sm:$0xf] %v351
  %v353 = vmul.f32 %v337, %v348
  %354 = vst [vmem:[%s4 + $0x4] sm:$0xf] %v353
  %355 = vst [vmem:[%s4 + $0x4] sm:$0x10] %v324
  // Predicated region
  $region18: #{vmpo_forward.1} parent=0 // pred_check
    _
  $region19: #{vmpo_forward.1} parent=0 // pred_check_branch
    %357 = sbr.rel (0) target = $region21
  $region20: #{vmpo_forward.1} parent=0 // pred_region
    _
  $region21: #{vmpo_forward.1} parent=0 // pred_fallthru
    _
  // Predicated region
  $region22: #{vmpo_forward.1} parent=0 // pred_check
    _
  $region23: #{vmpo_forward.1} parent=0 // pred_check_branch
    %359 = sbr.rel (0) target = $region25
  $region24: #{vmpo_forward.1} parent=0 // pred_region
    _
  $region25: #{vmpo_forward.1} parent=0 // pred_fallthru
    _

</llo_original>
